<compile_context>
chip_gen: v6e
topology: v6e:2x2x1
jax: 0.10.0
libtpu: 0.0.40
codegen_flags: <defaults>
</compile_context>

<pallas_src>
import functools

import jax
import jax.numpy as jnp
from jax import lax
from jax.experimental import pallas as pl
from jax.experimental.pallas import tpu as pltpu


def _encoder_kernel(x_ref, w_ref, b_ref, o_ref):
    # x_ref: (Bt, L*H)   flattened past-state tile
    # w_ref: (L*H, O)    folded effective weights (taps + 1/L mean already applied)
    # b_ref: (1, O)      positional contribution + conv bias
    # o_ref: (Bt, O)
    o_ref[...] = (
        jnp.dot(x_ref[...], w_ref[...], preferred_element_type=jnp.float32)
        + b_ref[...]
    ).astype(o_ref.dtype)


def _pick_batch_tile(B):
    """Large tiles (amortize ~0.35us/step), multiple of 8, >=2 grid steps for large B (v7x 2 TCs)."""
    if B <= 8:
        return B
    half = -(-B // 2)            # ceil(B / 2)  -> at least 2 grid steps
    half = -(-half // 8) * 8     # round up to a multiple of 8 (sublane alignment)
    return min(8192, half)       # x tile is only bt*L*H*4 bytes; VMEM is a non-issue


def make_past_state_encoder(emb_w, conv_w, conv_b, seq_len, *, dtype=None):
    """Prepares folded weights ONCE and returns a jitted encoder: x (B, L, H) -> (B, O).

    emb_w : (timesteps, features) positional-embedding table
    conv_w: (O, 2*features, 3)    Conv1d weight (PyTorch OIH layout)
    conv_b: (O,)                  Conv1d bias
    """
    O, Cin, K = conv_w.shape
    H = Cin // 2
    assert Cin == 2 * H and K == 3
    L = int(seq_len)
    assert L <= emb_w.shape[0], "sequence length exceeds embedding table"
    if dtype is None:
        dtype = conv_w.dtype

    # ---- one-time weight prep (trace-/construction-time, NOT per forward call) ----
    w_t = jnp.transpose(jnp.asarray(conv_w, jnp.float32), (2, 1, 0))   # (3, 2H, O) tap-major
    w0, w1, w2 = w_t[0], w_t[1], w_t[2]                                # pair with x[t-1]/x[t]/x[t+1]
    inv_l = jnp.float32(1.0 / L)
    if L == 1:
        w_eff = (w1 * inv_l)[None]                                     # (1, 2H, O)
    else:
        mid = jnp.broadcast_to((w0 + w1 + w2)[None], (L - 2, 2 * H, O))
        w_eff = jnp.concatenate(
            [(w0 + w1)[None], mid, (w1 + w2)[None]], axis=0) * inv_l   # (L, 2H, O)

    w_state = w_eff[:, :H, :].reshape(L * H, O).astype(dtype)          # state-channel half
    w_pos = w_eff[:, H:, :]                                            # (L, H, O) positional half

    pos = jnp.asarray(emb_w, jnp.float32)[:L]                          # embedding(arange(L)) = static slice
    b_eff = (jnp.einsum("th,tho->o", pos, w_pos)
             + jnp.asarray(conv_b, jnp.float32)).reshape(1, O)         # batch-invariant, folded bias

    def encode(x, *, batch_tile=None):
        B, Lx, Hx = x.shape
        assert Lx == L and Hx == H
        x2d = x.reshape(B, L * H).astype(dtype)                        # lane-dense 2-D operand
        bt = _pick_batch_tile(B) if batch_tile is None else batch_tile
        grid = (pl.cdiv(B, bt),)

        return pl.pallas_call(
            _encoder_kernel,
            out_shape=jax.ShapeDtypeStruct((B, O), jnp.float32),
            grid_spec=pltpu.PrefetchScalarGridSpec(
                num_scalar_prefetch=0,
                grid=grid,
                in_specs=[
                    pl.BlockSpec((bt, L * H), lambda i: (i, 0)),       # x: tiled over batch
                    pl.BlockSpec((L * H, O), lambda i: (0, 0)),        # folded weights (grid-invariant)
                    pl.BlockSpec((1, O), lambda i: (0, 0)),            # folded bias   (grid-invariant)
                ],
                out_specs=pl.BlockSpec((bt, O), lambda i: (i, 0)),
            ),
            compiler_params=pltpu.CompilerParams(
                dimension_semantics=("parallel",)),
        )(x2d, w_state, b_eff)

    # TODO(synk): for very large B and store-bound profiles, present a lane-dense (B/4, 128) output
    # view instead of O=32 masked stores (per review, only worth it if profiling shows it).
    return jax.jit(encode, static_argnames=("batch_tile",))


def past_state_encoder_ref(x, emb_w, conv_w, conv_b):
    """Pure-JAX reference mirroring the PyTorch forward exactly."""
    B, L, H = x.shape
    x_cat = jnp.concatenate(
        [x, jnp.broadcast_to(emb_w[:L][None, :, :], (B, L, H))], axis=-1)
    xt = jnp.transpose(x_cat, (0, 2, 1))                               # (B, C, L) == NCW
    y = lax.conv_general_dilated(
        xt, conv_w, window_strides=(1,), padding=[(1, 1)],
        dimension_numbers=("NCH", "OIH", "NCH"))
    y = y + conv_b[None, :, None]
    return y.mean(axis=-1)


if __name__ == "__main__":
    # The module's forward hardcodes .view(1, L, 4) -> features must be 4.
    B, L = 2, 8
    features = 4
    timesteps = 16
    output_size = 32

    key = jax.random.PRNGKey(0)
    kx, ke, kw, kb, kx2 = jax.random.split(key, 5)
    x = jax.random.normal(kx, (B, L, features), dtype=jnp.float32)
    emb_w = jax.random.normal(ke, (timesteps, features), dtype=jnp.float32)
    fan_in = 2 * features * 3
    conv_w = jax.random.normal(
        kw, (output_size, 2 * features, 3), dtype=jnp.float32) / jnp.sqrt(jnp.float32(fan_in))
    conv_b = 0.1 * jax.random.normal(kb, (output_size,), dtype=jnp.float32)

    encoder = make_past_state_encoder(emb_w, conv_w, conv_b, seq_len=L)

    # Shipped shape (B=2): single grid step.
    out = jax.block_until_ready(encoder(x))
    ref = past_state_encoder_ref(x, emb_w, conv_w, conv_b)
    assert out.shape == (B, output_size)
    assert jnp.allclose(out, ref, atol=1e-4, rtol=1e-4), (out, ref)

    # Larger batch: exercises the tiled "parallel" grid (>=2 steps) and a partial last tile.
    B2 = 50
    x2 = jax.random.normal(kx2, (B2, L, features), dtype=jnp.float32)
    out2 = jax.block_until_ready(encoder(x2))
    ref2 = past_state_encoder_ref(x2, emb_w, conv_w, conv_b)
    assert out2.shape == (B2, output_size)
    assert jnp.allclose(out2, ref2, atol=1e-4, rtol=1e-4), (out2, ref2)

    print("KERNEL_OK")
</pallas_src>

<mosaic_0001>
module attributes {stable_mosaic.version = 11 : i64} {
  func.func @_encoder_kernel(%arg0: i32, %arg1: memref<2x32xf32, #tpu.memory_space<vmem>>, %arg2: memref<32x32xf32, #tpu.memory_space<vmem>>, %arg3: memref<1x32xf32, #tpu.memory_space<vmem>>, %arg4: memref<2x32xf32, #tpu.memory_space<vmem>>) attributes {dimension_semantics = [#tpu.dimension_semantics<parallel>], iteration_bounds = array<i64: 1>, scalar_prefetch = 0 : i64, scratch_operands = 0 : i64, tpu.core_type = #tpu.core_type<tc>, window_params = [{transform_indices = @transform_0, window_bounds = array<i64: 2, 32>}, {pipeline_mode = #tpu.pipeline_mode<synchronous>, transform_indices = @transform_1, window_bounds = array<i64: 32, 32>}, {pipeline_mode = #tpu.pipeline_mode<synchronous>, transform_indices = @transform_2, window_bounds = array<i64: 1, 32>}, {transform_indices = @transform_3, window_bounds = array<i64: 2, 32>}]} {
    %c0 = arith.constant 0 : index
    %c0_0 = arith.constant 0 : index
    %0 = vector.load %arg1[%c0, %c0_0] : memref<2x32xf32, #tpu.memory_space<vmem>>, vector<2x32xf32>
    %c0_1 = arith.constant 0 : index
    %c0_2 = arith.constant 0 : index
    %1 = vector.load %arg2[%c0_1, %c0_2] : memref<32x32xf32, #tpu.memory_space<vmem>>, vector<32x32xf32>
    %cst = arith.constant dense<0.000000e+00> : vector<2x32xf32>
    %2 = tpu.matmul %0, %1, %cst {dimension_numbers = #tpu.dot_dimension_numbers<[1], [0], [0], [1], [0, 0, 1, 1], [], []>} : vector<2x32xf32>, vector<32x32xf32>, vector<2x32xf32> -> vector<2x32xf32>
    %c0_3 = arith.constant 0 : index
    %c0_4 = arith.constant 0 : index
    %3 = vector.load %arg3[%c0_3, %c0_4] : memref<1x32xf32, #tpu.memory_space<vmem>>, vector<1x32xf32>
    %4 = vector.broadcast %3 : vector<1x32xf32> to vector<2x32xf32>
    %5 = arith.addf %2, %4 : vector<2x32xf32>
    %c0_5 = arith.constant 0 : index
    %c0_6 = arith.constant 0 : index
    %6 = vector.load %arg4[%c0_5, %c0_6] : memref<2x32xf32, #tpu.memory_space<vmem>>, vector<2x32xf32>
    tpu.vector_store %arg4[%c0_5, %c0_6], %5 {strides = array<i32>} : memref<2x32xf32, #tpu.memory_space<vmem>>, vector<2x32xf32>,
    return
  }
  func.func @transform_0(%arg0: i32) -> (i32, i32) {
    %c0_i32 = arith.constant 0 : i32
    %c0_i32_0 = arith.constant 0 : i32
    return %arg0, %c0_i32 : i32, i32
  }
  func.func @transform_1(%arg0: i32) -> (i32, i32) {
    %c0_i32 = arith.constant 0 : i32
    %c0_i32_0 = arith.constant 0 : i32
    %c0_i32_1 = arith.constant 0 : i32
    return %c0_i32, %c0_i32_0 : i32, i32
  }
  func.func @transform_2(%arg0: i32) -> (i32, i32) {
    %c0_i32 = arith.constant 0 : i32
    %c0_i32_0 = arith.constant 0 : i32
    %c0_i32_1 = arith.constant 0 : i32
    return %c0_i32, %c0_i32_0 : i32, i32
  }
  func.func @transform_3(%arg0: i32) -> (i32, i32) {
    %c0_i32 = arith.constant 0 : i32
    %c0_i32_0 = arith.constant 0 : i32
    return %arg0, %c0_i32 : i32, i32
  }
}

</mosaic_0001>

<llo_original>
// kernel: encode.1
$region0: #{encode.1}
  #allocation0 [shape = 'u32[]', space=smem, size = 0x4, offset = 0x4, fixed_abs, tag = 'smem constant byte address 0x4 - core index']
  #allocation1 [shape = 'u32[144,128]{1,0:T(1,128)}', space=vmem, size = 0x12000, scoped, tag = 'internal scratch']
  %s0 = inlined_call_operand.vmem [shape: f32[2,32], index: 0, kind: input, shape index: {}]
  %s1 = inlined_call_operand.vmem [shape: f32[32,32], index: 1, kind: input, shape index: {}]
  %s2 = inlined_call_operand.vmem [shape: f32[1,32], index: 2, kind: input, shape index: {}]
  %s3 = inlined_call_operand.hbm [shape: f32[2,32], index: 3, kind: output, shape index: {}]
  %s4 = sld [smem:[#allocation0]]
  $region22: #{encode.1} parent=0
    _
  %s6 = ssub.s32 1, %s4
  %s7 = scalar_select 0, %s6, %s4
  $region1: #{encode.1} parent=0
    #allocation2 [shape = 'u8[1024]{0}', space=vmem, size = 0x400, scoped, tag = 'output window, operand 0, single buffered']
    #allocation3 [shape = 's32[1]{0}', space=sflag, size = 0x4, scoped, tag = 'scoped memory for encode.1']
    %8 = vsyncpa [#allocation3], 0
    // Predicated region
    $region2: #{encode.1} parent=1 // pred_check
      _
    $region3: #{encode.1} parent=1 // pred_check_branch
      %10 = sbr.rel (0) target = $region5
    $region4: #{encode.1} parent=1 // pred_region
      _
    $region5: #{encode.1} parent=1 // pred_fallthru
      _
    // Predicated region
    $region6: #{encode.1} parent=1 // pred_check
      _
    $region7: #{encode.1} parent=1 // pred_check_branch
      %12 = sbr.rel (0) target = $region9
    $region8: #{encode.1} parent=1 // pred_region
      _
    $region9: #{encode.1} parent=1 // pred_fallthru
      _
    // Predicated region
    $region10: #{encode.1} parent=1 // pred_check
      _
    $region11: #{encode.1} parent=1 // pred_check_branch
      %14 = sbr.rel (0) target = $region13
    $region12: #{encode.1} parent=1 // pred_region
      _
    $region13: #{encode.1} parent=1 // pred_fallthru
      _
    %v15 = vld [vmem:[%s0] sm:$0x3]
    %v16 = vld [vmem:[%s1] sm:$0xff]
    %v17 = vld [vmem:[%s1 + $0x8] sm:$0xff]
    %v18 = vld [vmem:[%s1 + $0x10] sm:$0xff]
    %v19 = vld [vmem:[%s1 + $0x18] sm:$0xff]
    %v20 = vld [vmem:[%s2] sm:$0x1]
    %v22 = vlaneseq
    %v23 = vshrl.u32 %v22, 7
    %v24 = vsub.s32 0, %v23
    %v25 = vrot.slane %v20, %v24
    %vm27 = vcmask 261120
    %v29 = vsel %vm27, %v15, 0
    %31 = vmatprep.subr.mxu0 0.0
    %32 = vmatpush1.msra.mxu0 0.0
    %33 = vmatprep.subr.mxu0 0.0
    %34 = vmatpush1.msra.mxu0 0.0
    %35 = vmatprep.subr.mxu0 0.0
    %36 = vmatpush1.msra.mxu0 0.0
    %37 = vmatprep.subr.mxu0 0.0
    %38 = vmatpush1.msra.mxu0 0.0
    %39 = vmatprep.subr.mxu0 0.0
    %40 = vmatpush1.msra.mxu0 0.0
    %41 = vmatprep.subr.mxu0 0.0
    %42 = vmatpush1.msra.mxu0 0.0
    %43 = vmatprep.subr.mxu0 0.0
    %44 = vmatpush1.msra.mxu0 0.0
    %45 = vmatprep.subr.mxu0 0.0
    %46 = vmatpush1.msra.mxu0 0.0
    %47 = vmatprep.subr.mxu0 0.0
    %48 = vmatpush1.msra.mxu0 0.0
    %49 = vmatprep.subr.mxu0 0.0
    %50 = vmatpush1.msra.mxu0 0.0
    %51 = vmatprep.subr.mxu0 0.0
    %52 = vmatpush1.msra.mxu0 0.0
    %53 = vmatprep.subr.mxu0 0.0
    %54 = vmatpush1.msra.mxu0 0.0
    %55 = vmatprep.subr.mxu0 0.0
    %56 = vmatpush1.msra.mxu0 %v19
    %57 = vmatprep.subr.mxu0 0.0
    %58 = vmatpush1.msra.mxu0 %v18
    %59 = vmatprep.subr.mxu0 0.0
    %60 = vmatpush1.msra.mxu0 %v17
    %61 = vmatprep.subr.mxu0 0.0
    %62 = vmatpush1.msra.mxu0 %v16
    %63 = vmatprep.subr.mxu0 0.0
    %64 = vmatpush2.msra.mxu0 0.0
    %65 = vmatprep.subr.mxu0 0.0
    %66 = vmatpush2.msra.mxu0 0.0
    %67 = vmatprep.subr.mxu0 0.0
    %68 = vmatpush2.msra.mxu0 0.0
    %69 = vmatprep.subr.mxu0 0.0
    %70 = vmatpush2.msra.mxu0 0.0
    %71 = vmatprep.subr.mxu0 0.0
    %72 = vmatpush2.msra.mxu0 0.0
    %73 = vmatprep.subr.mxu0 0.0
    %74 = vmatpush2.msra.mxu0 0.0
    %75 = vmatprep.subr.mxu0 0.0
    %76 = vmatpush2.msra.mxu0 0.0
    %77 = vmatprep.subr.mxu0 0.0
    %78 = vmatpush2.msra.mxu0 0.0
    %79 = vmatprep.subr.mxu0 0.0
    %80 = vmatpush2.msra.mxu0 0.0
    %81 = vmatprep.subr.mxu0 0.0
    %82 = vmatpush2.msra.mxu0 0.0
    %83 = vmatprep.subr.mxu0 0.0
    %84 = vmatpush2.msra.mxu0 0.0
    %85 = vmatprep.subr.mxu0 0.0
    %86 = vmatpush2.msra.mxu0 0.0
    %87 = vmatprep.subr.mxu0 0.0
    %88 = vmatpush2.msra.mxu0 0.0
    %89 = vmatprep.subr.mxu0 0.0
    %90 = vmatpush2.msra.mxu0 0.0
    %91 = vmatprep.subr.mxu0 0.0
    %92 = vmatpush2.msra.mxu0 0.0
    %93 = vmatprep.subr.mxu0 0.0
    %94 = vmatpush2.msra.mxu0 0.0
    %95 = vmatprep.mubr.f32.mxu0 0.0
    %96 = vmatmul.mubr.f32.gmra.mxu0 %v29
    %v97 = vpop.f32.mrf.mxu0
    %v98 = vadd.f32 %v25, %v97
    %v99 = vpop.f32.mrf.mxu0
    %100 = vdwg.mxu0
    %vm101 = vcmask 254976
    %102 = vst.msk [vmem:[#allocation2] sm:$0x3] %vm101, %v98
    // Predicated region
    $region14: #{encode.1} parent=1 // pred_check
      _
    $region15: #{encode.1} parent=1 // pred_check_branch
      %104 = sbr.rel (0) target = $region17
    $region16: #{encode.1} parent=1 // pred_region
      %s106 = ssub.s32 32, 32
      %107 = vsyncadd [#allocation3], %s106
      %s109 = sshll.u32 [#allocation2], 4
      %s110 = int_to_ptr.vmem [resolvable:$true] %s109
      %112 = dma.vmem_to_hbm [thread:$0]  %s110, 32, %s3, [#allocation3]
    $region17: #{encode.1} parent=1 // pred_fallthru
      _
    // Predicated region
    $region18: #{encode.1} parent=1 // pred_check
      _
    $region19: #{encode.1} parent=1 // pred_check_branch
      %114 = sbr.rel (0) target = $region21
    $region20: #{encode.1} parent=1 // pred_region
      %115 = dma.done [#allocation3], 32
    $region21: #{encode.1} parent=1 // pred_fallthru
      _
    %116 = vsyncpa [#allocation3], 1

</llo_original>
